<compile_context>
chip_gen: v7x
topology: tpu7x:2x2x1
jax: 0.10.0
libtpu: 0.0.40
codegen_flags: <defaults>
</compile_context>

<pallas_src>
import jax
import jax.numpy as jnp
from jax.experimental import pallas as pl
from jax.experimental.pallas import tpu as pltpu


# Packed per-client parameter row (one row of the (n_clients, 16) f32 SMEM table):
#   [0:3]  w_ih  (w_ir, w_iz, w_in)
#   [3:6]  w_hh  (w_hr, w_hz, w_hn)
#   [6]    b_r  = b_ir + b_hr     (fold is exact for the r gate)
#   [7]    b_z  = b_iz + b_hz     (fold is exact for the z gate)
#   [8]    b_in                   (NOT folded: b_hn must stay inside r*(...))
#   [9]    b_hn
#   [10]   fc_w
#   [11]   fc_b
#   [12:16] padding


def gru_kernel(p_ref, x_ref, o_ref, gxr_ref, gxz_ref, gxn_ref):
    """One (client, batch-tile) grid step.

    p_ref  : (C, 16) f32 SMEM            -- per-client packed parameters
    x_ref  : (T, 8, L) f32 VMEM          -- batch on sublanes AND lanes
    o_ref  : (8, L)   f32 VMEM           -- lane/sublane-dense unmasked store
    gx*_ref: (T, 8, L) f32 VMEM scratch  -- bulk x-projections
    """
    c = pl.program_id(0)
    T = x_ref.shape[0]

    # Scalar reads hoisted once per grid step (SMEM -> sreg).
    wir, wiz, win_ = p_ref[c, 0], p_ref[c, 1], p_ref[c, 2]
    whr, whz, whn = p_ref[c, 3], p_ref[c, 4], p_ref[c, 5]
    br, bz = p_ref[c, 6], p_ref[c, 7]
    bin_, bhn = p_ref[c, 8], p_ref[c, 9]
    fcw, fcb = p_ref[c, 10], p_ref[c, 11]

    # Bulk, whole-tile precompute of the x-dependent gate pre-activations.
    x = x_ref[...]                                    # (T, 8, L)
    gxr_ref[...] = wir * x + br
    gxz_ref[...] = wiz * x + bz
    gxn_ref[...] = win_ * x + bin_

    # Serial recurrence over T (small & static -> fully unrolled).  Only the
    # h-dependent math remains; every operand is a full (8, L) vreg set.
    h = jnp.zeros(o_ref.shape, jnp.float32)           # (8, L)
    for t in range(T):
        pre_r = gxr_ref[t] + whr * h
        pre_z = gxz_ref[t] + whz * h
        # sigmoid(p) == 0.5 * tanh(0.5 * p) + 0.5  -> exactly one EUP push.
        r = 0.5 * jnp.tanh(0.5 * pre_r) + 0.5
        z = 0.5 * jnp.tanh(0.5 * pre_z) + 0.5
        n = jnp.tanh(gxn_ref[t] + r * (whn * h + bhn))
        h = n + z * (h - n)                           # == (1 - z) * n + z * h

    # fc: output_size == hidden_size == 1 -> scalar affine of the last step.
    o_ref[...] = fcw * h + fcb


def _pack_params_row(p):
    w_ih = jnp.asarray(p["w_ih"], jnp.float32).reshape(-1)
    w_hh = jnp.asarray(p["w_hh"], jnp.float32).reshape(-1)
    b_ih = jnp.asarray(p["b_ih"], jnp.float32).reshape(-1)
    b_hh = jnp.asarray(p["b_hh"], jnp.float32).reshape(-1)
    fc_w = jnp.asarray(p["fc_w"], jnp.float32).reshape(-1)
    fc_b = jnp.asarray(p["fc_b"], jnp.float32).reshape(-1)
    row = jnp.stack([
        w_ih[0], w_ih[1], w_ih[2],
        w_hh[0], w_hh[1], w_hh[2],
        b_ih[0] + b_hh[0],          # folded r-gate bias
        b_ih[1] + b_hh[1],          # folded z-gate bias
        b_ih[2],                    # b_in (kept separate from b_hn)
        b_hh[2],                    # b_hn (applied inside r * (...))
        fc_w[0], fc_b[0],
    ])
    return jnp.pad(row, (0, 16 - row.shape[0]))


def pack_param_table(params_list):
    """List of per-client param dicts -> (n_clients, 16) f32 table."""
    return jnp.stack([_pack_params_row(p) for p in params_list])


def _choose_tile_l(bp8, cap=4096):
    # bp8 is a multiple of 128; pick the largest divisor of bp8 that is a
    # multiple of 128 and <= cap (keeps double-buffered blocks + scratch a few
    # MiB -- safely under v5e's 16 MiB scoped VMEM and v7x's 64 MiB physical).
    t = min(bp8, cap)
    t -= t % 128
    while bp8 % t:
        t -= 128
    return t


def grunet_forward_clients_time_major(xt, param_table, *, tile_l=None):
    """Fused multi-client GRUNet forward.

    xt          : (C, T, B) f32, time-major sequences per client.
    param_table : (C, 16) f32 packed per-client parameters (pack_param_table).
    Returns (C, B) f32 -- fc(gru(x)[0][:, -1, :]) per client, per batch row.
    """
    xt = xt.astype(jnp.float32)
    C, T, B = xt.shape
    bp = ((B + 1023) // 1024) * 1024          # multiple of 8*128 -> full vregs
    bp8 = bp // 8
    if tile_l is None:
        tile_l = _choose_tile_l(bp8)
    assert tile_l % 128 == 0 and bp8 % tile_l == 0
    if bp != B:
        # Zero padding: padded lanes flow through tanh harmlessly, sliced off.
        xt = jnp.pad(xt, ((0, 0), (0, 0), (0, bp - B)))
    x4 = xt.reshape(C, T, 8, bp8)             # free row-major reshape

    out = pl.pallas_call(
        gru_kernel,
        out_shape=jax.ShapeDtypeStruct((C, 8, bp8), jnp.float32),
        grid_spec=pltpu.PrefetchScalarGridSpec(
            num_scalar_prefetch=0,
            grid=(C, bp8 // tile_l),
            in_specs=[
                pl.BlockSpec(memory_space=pltpu.MemorySpace.SMEM),   # param table
                pl.BlockSpec((None, T, 8, tile_l), lambda c, i: (c, 0, 0, i)),
            ],
            out_specs=pl.BlockSpec((None, 8, tile_l), lambda c, i: (c, 0, i)),
            scratch_shapes=[pltpu.VMEM((T, 8, tile_l), jnp.float32)] * 3,
        ),
        compiler_params=pltpu.CompilerParams(
            # (client, tile) steps are fully independent -> both axes parallel
            # so v7x shards them across its two TensorCores.
            dimension_semantics=("parallel", "parallel")),
    )(param_table, x4)

    return out.reshape(C, bp)[:, :B]


def grunet_forward_clients(x, params_list, *, tile_l=None):
    """Batch-first convenience wrapper. x: (C, B, T, 1) -> (C, B, 1).

    Each client c uses its OWN parameter set params_list[c] (Reptile-adapted).
    For large fused batches, produce time-major data upstream and call
    grunet_forward_clients_time_major directly to skip the transpose pass.
    """
    C, B, T, _ = x.shape
    xt = jnp.transpose(x[..., 0].astype(jnp.float32), (0, 2, 1))   # (C, T, B)
    table = pack_param_table(params_list)
    h = grunet_forward_clients_time_major(xt, table, tile_l=tile_l)
    return h[..., None]


def grunet_forward(x, params, *, tile_l=None):
    """Single-parameter-set forward matching torch: x (B, T, 1) -> (B, 1)."""
    return grunet_forward_clients(x[None], [params], tile_l=tile_l)[0]


def init_params(key):
    # PyTorch init: GRU & Linear params ~ U(-1/sqrt(hidden), 1/sqrt(hidden));
    # hidden = 1 -> U(-1, 1).
    ks = jax.random.split(key, 6)
    u = lambda k, shape: jax.random.uniform(k, shape, jnp.float32, -1.0, 1.0)
    return {
        "w_ih": u(ks[0], (3,)),   # weight_ih_l0: (3*hidden, input) flattened
        "w_hh": u(ks[1], (3,)),   # weight_hh_l0
        "b_ih": u(ks[2], (3,)),   # bias_ih_l0
        "b_hh": u(ks[3], (3,)),   # bias_hh_l0
        "fc_w": u(ks[4], (1,)),   # fc.weight (1,1) flattened
        "fc_b": u(ks[5], (1,)),   # fc.bias
    }


def grunet_reference(x, p):
    """Pure-JAX reference of torch nn.GRU(1,1,1,batch_first) + Linear(1,1)."""
    B, T, _ = x.shape
    h = jnp.zeros((B,), jnp.float32)
    for t in range(T):
        xt = x[:, t, 0]
        r = jax.nn.sigmoid(p["w_ih"][0] * xt + p["b_ih"][0] + p["w_hh"][0] * h + p["b_hh"][0])
        z = jax.nn.sigmoid(p["w_ih"][1] * xt + p["b_ih"][1] + p["w_hh"][1] * h + p["b_hh"][1])
        n = jnp.tanh(p["w_ih"][2] * xt + p["b_ih"][2] + r * (p["w_hh"][2] * h + p["b_hh"][2]))
        h = (1.0 - z) * n + z * h
    return (p["fc_w"][0] * h + p["fc_b"][0]).reshape(B, 1)


if __name__ == "__main__":
    key = jax.random.PRNGKey(0)
    k_meta, k_pert, k_x1, k_x2 = jax.random.split(key, 4)

    # seq_len=6 / input_size=1 per GRUNet(...); 3 clients x batch_size=100,
    # each client with its OWN (Reptile-adapted) parameter set, fused into one
    # pallas_call via the (C, 16) SMEM parameter table.
    C, B, T = 3, 100, 6
    meta = init_params(k_meta)
    client_params = []
    for c, pk in enumerate(jax.random.split(k_pert, C)):
        dks = jax.random.split(pk, 6)
        client_params.append({name: val + 0.05 * jax.random.normal(dks[i], val.shape)
                              for i, (name, val) in enumerate(meta.items())})

    x = jax.random.normal(k_x1, (C, B, T, 1), jnp.float32)
    table = pack_param_table(client_params)
    xt = jnp.transpose(x[..., 0], (0, 2, 1))                      # (C, T, B)

    fwd = jax.jit(grunet_forward_clients_time_major)
    out = jax.block_until_ready(fwd(xt, table))                   # (C, B)
    assert out.shape == (C, B)
    for c in range(C):
        ref_c = grunet_reference(x[c], client_params[c])[:, 0]
        assert jnp.allclose(out[c], ref_c, atol=1e-5, rtol=1e-5), f"client {c}"

    # Second check: larger padded batch, forced tile_l=128 -> multi-tile grid
    # (2 clients x 2 batch tiles) exercising padding and the tile index_map.
    C2, B2 = 2, 1500
    x2 = jax.random.normal(k_x2, (C2, B2, T, 1), jnp.float32)
    params2 = client_params[:C2]
    fwd2 = jax.jit(lambda a, b: grunet_forward_clients_time_major(a, b, tile_l=128))
    out2 = jax.block_until_ready(
        fwd2(jnp.transpose(x2[..., 0], (0, 2, 1)), pack_param_table(params2)))
    for c in range(C2):
        ref_c = grunet_reference(x2[c], params2[c])[:, 0]
        assert jnp.allclose(out2[c], ref_c, atol=1e-5, rtol=1e-5), f"client {c}"

    print("KERNEL_OK")
</pallas_src>

<mosaic_0001>
module attributes {stable_mosaic.version = 11 : i64} {
  func.func @gru_kernel(%arg0: i32, %arg1: i32, %arg2: memref<3x16xf32, #tpu.memory_space<smem>>, %arg3: memref<1x6x8x128xf32, #tpu.memory_space<vmem>>, %arg4: memref<1x8x128xf32, #tpu.memory_space<vmem>>, %arg5: memref<6x8x128xf32, #tpu.memory_space<vmem>>, %arg6: memref<6x8x128xf32, #tpu.memory_space<vmem>>, %arg7: memref<6x8x128xf32, #tpu.memory_space<vmem>>) attributes {dimension_semantics = [#tpu.dimension_semantics<parallel>, #tpu.dimension_semantics<parallel>], iteration_bounds = array<i64: 3, 1>, scalar_prefetch = 0 : i64, scratch_operands = 3 : i64, tpu.core_type = #tpu.core_type<tc>, window_params = [{transform_indices = @transform_0, window_bounds = array<i64: 3, 16>}, {transform_indices = @transform_1, window_bounds = array<i64: 1, 6, 8, 128>}, {transform_indices = @transform_2, window_bounds = array<i64: 1, 8, 128>}]} {
    %0 = arith.index_cast %arg0 : i32 to index
    %c0 = arith.constant 0 : index
    %1 = memref.load %arg2[%0, %c0] : memref<3x16xf32, #tpu.memory_space<smem>>
    %2 = arith.index_cast %arg0 : i32 to index
    %c1 = arith.constant 1 : index
    %3 = memref.load %arg2[%2, %c1] : memref<3x16xf32, #tpu.memory_space<smem>>
    %4 = arith.index_cast %arg0 : i32 to index
    %c2 = arith.constant 2 : index
    %5 = memref.load %arg2[%4, %c2] : memref<3x16xf32, #tpu.memory_space<smem>>
    %6 = arith.index_cast %arg0 : i32 to index
    %c3 = arith.constant 3 : index
    %7 = memref.load %arg2[%6, %c3] : memref<3x16xf32, #tpu.memory_space<smem>>
    %8 = arith.index_cast %arg0 : i32 to index
    %c4 = arith.constant 4 : index
    %9 = memref.load %arg2[%8, %c4] : memref<3x16xf32, #tpu.memory_space<smem>>
    %10 = arith.index_cast %arg0 : i32 to index
    %c5 = arith.constant 5 : index
    %11 = memref.load %arg2[%10, %c5] : memref<3x16xf32, #tpu.memory_space<smem>>
    %12 = arith.index_cast %arg0 : i32 to index
    %c6 = arith.constant 6 : index
    %13 = memref.load %arg2[%12, %c6] : memref<3x16xf32, #tpu.memory_space<smem>>
    %14 = arith.index_cast %arg0 : i32 to index
    %c7 = arith.constant 7 : index
    %15 = memref.load %arg2[%14, %c7] : memref<3x16xf32, #tpu.memory_space<smem>>
    %16 = arith.index_cast %arg0 : i32 to index
    %c8 = arith.constant 8 : index
    %17 = memref.load %arg2[%16, %c8] : memref<3x16xf32, #tpu.memory_space<smem>>
    %18 = arith.index_cast %arg0 : i32 to index
    %c9 = arith.constant 9 : index
    %19 = memref.load %arg2[%18, %c9] : memref<3x16xf32, #tpu.memory_space<smem>>
    %20 = arith.index_cast %arg0 : i32 to index
    %c10 = arith.constant 10 : index
    %21 = memref.load %arg2[%20, %c10] : memref<3x16xf32, #tpu.memory_space<smem>>
    %22 = arith.index_cast %arg0 : i32 to index
    %c11 = arith.constant 11 : index
    %23 = memref.load %arg2[%22, %c11] : memref<3x16xf32, #tpu.memory_space<smem>>
    %c0_0 = arith.constant 0 : index
    %c0_1 = arith.constant 0 : index
    %c0_2 = arith.constant 0 : index
    %c0_3 = arith.constant 0 : index
    %24 = vector.load %arg3[%c0_0, %c0_1, %c0_2, %c0_3] : memref<1x6x8x128xf32, #tpu.memory_space<vmem>>, vector<1x6x8x128xf32>
    %25 = vector.shape_cast %24 : vector<1x6x8x128xf32> to vector<6x8x128xf32>
    %26 = vector.broadcast %1 : f32 to vector<6x8x128xf32>
    %27 = arith.mulf %26, %25 : vector<6x8x128xf32>
    %28 = vector.broadcast %13 : f32 to vector<6x8x128xf32>
    %29 = arith.addf %27, %28 : vector<6x8x128xf32>
    %c0_4 = arith.constant 0 : index
    %c0_5 = arith.constant 0 : index
    %c0_6 = arith.constant 0 : index
    %30 = vector.load %arg5[%c0_4, %c0_5, %c0_6] : memref<6x8x128xf32, #tpu.memory_space<vmem>>, vector<6x8x128xf32>
    tpu.vector_store %arg5[%c0_4, %c0_5, %c0_6], %29 {strides = array<i32>} : memref<6x8x128xf32, #tpu.memory_space<vmem>>, vector<6x8x128xf32>,
    %31 = vector.broadcast %3 : f32 to vector<6x8x128xf32>
    %32 = arith.mulf %31, %25 : vector<6x8x128xf32>
    %33 = vector.broadcast %15 : f32 to vector<6x8x128xf32>
    %34 = arith.addf %32, %33 : vector<6x8x128xf32>
    %c0_7 = arith.constant 0 : index
    %c0_8 = arith.constant 0 : index
    %c0_9 = arith.constant 0 : index
    %35 = vector.load %arg6[%c0_7, %c0_8, %c0_9] : memref<6x8x128xf32, #tpu.memory_space<vmem>>, vector<6x8x128xf32>
    tpu.vector_store %arg6[%c0_7, %c0_8, %c0_9], %34 {strides = array<i32>} : memref<6x8x128xf32, #tpu.memory_space<vmem>>, vector<6x8x128xf32>,
    %36 = vector.broadcast %5 : f32 to vector<6x8x128xf32>
    %37 = arith.mulf %36, %25 : vector<6x8x128xf32>
    %38 = vector.broadcast %17 : f32 to vector<6x8x128xf32>
    %39 = arith.addf %37, %38 : vector<6x8x128xf32>
    %c0_10 = arith.constant 0 : index
    %c0_11 = arith.constant 0 : index
    %c0_12 = arith.constant 0 : index
    %40 = vector.load %arg7[%c0_10, %c0_11, %c0_12] : memref<6x8x128xf32, #tpu.memory_space<vmem>>, vector<6x8x128xf32>
    tpu.vector_store %arg7[%c0_10, %c0_11, %c0_12], %39 {strides = array<i32>} : memref<6x8x128xf32, #tpu.memory_space<vmem>>, vector<6x8x128xf32>,
    %cst = arith.constant 0.000000e+00 : f32
    %41 = vector.broadcast %cst : f32 to vector<8x128xf32>
    %c0_13 = arith.constant 0 : index
    %c0_14 = arith.constant 0 : index
    %c0_15 = arith.constant 0 : index
    %42 = vector.load %arg5[%c0_13, %c0_14, %c0_15] : memref<6x8x128xf32, #tpu.memory_space<vmem>>, vector<1x8x128xf32>
    %43 = vector.shape_cast %42 : vector<1x8x128xf32> to vector<8x128xf32>
    %44 = vector.broadcast %7 : f32 to vector<8x128xf32>
    %45 = arith.mulf %44, %41 : vector<8x128xf32>
    %46 = arith.addf %43, %45 : vector<8x128xf32>
    %c0_16 = arith.constant 0 : index
    %c0_17 = arith.constant 0 : index
    %c0_18 = arith.constant 0 : index
    %47 = vector.load %arg6[%c0_16, %c0_17, %c0_18] : memref<6x8x128xf32, #tpu.memory_space<vmem>>, vector<1x8x128xf32>
    %48 = vector.shape_cast %47 : vector<1x8x128xf32> to vector<8x128xf32>
    %49 = vector.broadcast %9 : f32 to vector<8x128xf32>
    %50 = arith.mulf %49, %41 : vector<8x128xf32>
    %51 = arith.addf %48, %50 : vector<8x128xf32>
    %cst_19 = arith.constant 5.000000e-01 : f32
    %52 = vector.broadcast %cst_19 : f32 to vector<8x128xf32>
    %53 = arith.mulf %52, %46 : vector<8x128xf32>
    %54 = math.tanh %53 : vector<8x128xf32>
    %cst_20 = arith.constant 5.000000e-01 : f32
    %55 = vector.broadcast %cst_20 : f32 to vector<8x128xf32>
    %56 = arith.mulf %55, %54 : vector<8x128xf32>
    %cst_21 = arith.constant 5.000000e-01 : f32
    %57 = vector.broadcast %cst_21 : f32 to vector<8x128xf32>
    %58 = arith.addf %56, %57 : vector<8x128xf32>
    %cst_22 = arith.constant 5.000000e-01 : f32
    %59 = vector.broadcast %cst_22 : f32 to vector<8x128xf32>
    %60 = arith.mulf %59, %51 : vector<8x128xf32>
    %61 = math.tanh %60 : vector<8x128xf32>
    %cst_23 = arith.constant 5.000000e-01 : f32
    %62 = vector.broadcast %cst_23 : f32 to vector<8x128xf32>
    %63 = arith.mulf %62, %61 : vector<8x128xf32>
    %cst_24 = arith.constant 5.000000e-01 : f32
    %64 = vector.broadcast %cst_24 : f32 to vector<8x128xf32>
    %65 = arith.addf %63, %64 : vector<8x128xf32>
    %c0_25 = arith.constant 0 : index
    %c0_26 = arith.constant 0 : index
    %c0_27 = arith.constant 0 : index
    %66 = vector.load %arg7[%c0_25, %c0_26, %c0_27] : memref<6x8x128xf32, #tpu.memory_space<vmem>>, vector<1x8x128xf32>
    %67 = vector.shape_cast %66 : vector<1x8x128xf32> to vector<8x128xf32>
    %68 = vector.broadcast %11 : f32 to vector<8x128xf32>
    %69 = arith.mulf %68, %41 : vector<8x128xf32>
    %70 = vector.broadcast %19 : f32 to vector<8x128xf32>
    %71 = arith.addf %69, %70 : vector<8x128xf32>
    %72 = arith.mulf %58, %71 : vector<8x128xf32>
    %73 = arith.addf %67, %72 : vector<8x128xf32>
    %74 = math.tanh %73 : vector<8x128xf32>
    %75 = arith.subf %41, %74 : vector<8x128xf32>
    %76 = arith.mulf %65, %75 : vector<8x128xf32>
    %77 = arith.addf %74, %76 : vector<8x128xf32>
    %c1_28 = arith.constant 1 : index
    %c0_29 = arith.constant 0 : index
    %c0_30 = arith.constant 0 : index
    %78 = vector.load %arg5[%c1_28, %c0_29, %c0_30] : memref<6x8x128xf32, #tpu.memory_space<vmem>>, vector<1x8x128xf32>
    %79 = vector.shape_cast %78 : vector<1x8x128xf32> to vector<8x128xf32>
    %80 = vector.broadcast %7 : f32 to vector<8x128xf32>
    %81 = arith.mulf %80, %77 : vector<8x128xf32>
    %82 = arith.addf %79, %81 : vector<8x128xf32>
    %c1_31 = arith.constant 1 : index
    %c0_32 = arith.constant 0 : index
    %c0_33 = arith.constant 0 : index
    %83 = vector.load %arg6[%c1_31, %c0_32, %c0_33] : memref<6x8x128xf32, #tpu.memory_space<vmem>>, vector<1x8x128xf32>
    %84 = vector.shape_cast %83 : vector<1x8x128xf32> to vector<8x128xf32>
    %85 = vector.broadcast %9 : f32 to vector<8x128xf32>
    %86 = arith.mulf %85, %77 : vector<8x128xf32>
    %87 = arith.addf %84, %86 : vector<8x128xf32>
    %cst_34 = arith.constant 5.000000e-01 : f32
    %88 = vector.broadcast %cst_34 : f32 to vector<8x128xf32>
    %89 = arith.mulf %88, %82 : vector<8x128xf32>
    %90 = math.tanh %89 : vector<8x128xf32>
    %cst_35 = arith.constant 5.000000e-01 : f32
    %91 = vector.broadcast %cst_35 : f32 to vector<8x128xf32>
    %92 = arith.mulf %91, %90 : vector<8x128xf32>
    %cst_36 = arith.constant 5.000000e-01 : f32
    %93 = vector.broadcast %cst_36 : f32 to vector<8x128xf32>
    %94 = arith.addf %92, %93 : vector<8x128xf32>
    %cst_37 = arith.constant 5.000000e-01 : f32
    %95 = vector.broadcast %cst_37 : f32 to vector<8x128xf32>
    %96 = arith.mulf %95, %87 : vector<8x128xf32>
    %97 = math.tanh %96 : vector<8x128xf32>
    %cst_38 = arith.constant 5.000000e-01 : f32
    %98 = vector.broadcast %cst_38 : f32 to vector<8x128xf32>
    %99 = arith.mulf %98, %97 : vector<8x128xf32>
    %cst_39 = arith.constant 5.000000e-01 : f32
    %100 = vector.broadcast %cst_39 : f32 to vector<8x128xf32>
    %101 = arith.addf %99, %100 : vector<8x128xf32>
    %c1_40 = arith.constant 1 : index
    %c0_41 = arith.constant 0 : index
    %c0_42 = arith.constant 0 : index
    %102 = vector.load %arg7[%c1_40, %c0_41, %c0_42] : memref<6x8x128xf32, #tpu.memory_space<vmem>>, vector<1x8x128xf32>
    %103 = vector.shape_cast %102 : vector<1x8x128xf32> to vector<8x128xf32>
    %104 = vector.broadcast %11 : f32 to vector<8x128xf32>
    %105 = arith.mulf %104, %77 : vector<8x128xf32>
    %106 = vector.broadcast %19 : f32 to vector<8x128xf32>
    %107 = arith.addf %105, %106 : vector<8x128xf32>
    %108 = arith.mulf %94, %107 : vector<8x128xf32>
    %109 = arith.addf %103, %108 : vector<8x128xf32>
    %110 = math.tanh %109 : vector<8x128xf32>
    %111 = arith.subf %77, %110 : vector<8x128xf32>
    %112 = arith.mulf %101, %111 : vector<8x128xf32>
    %113 = arith.addf %110, %112 : vector<8x128xf32>
    %c2_43 = arith.constant 2 : index
    %c0_44 = arith.constant 0 : index
    %c0_45 = arith.constant 0 : index
    %114 = vector.load %arg5[%c2_43, %c0_44, %c0_45] : memref<6x8x128xf32, #tpu.memory_space<vmem>>, vector<1x8x128xf32>
    %115 = vector.shape_cast %114 : vector<1x8x128xf32> to vector<8x128xf32>
    %116 = vector.broadcast %7 : f32 to vector<8x128xf32>
    %117 = arith.mulf %116, %113 : vector<8x128xf32>
    %118 = arith.addf %115, %117 : vector<8x128xf32>
    %c2_46 = arith.constant 2 : index
    %c0_47 = arith.constant 0 : index
    %c0_48 = arith.constant 0 : index
    %119 = vector.load %arg6[%c2_46, %c0_47, %c0_48] : memref<6x8x128xf32, #tpu.memory_space<vmem>>, vector<1x8x128xf32>
    %120 = vector.shape_cast %119 : vector<1x8x128xf32> to vector<8x128xf32>
    %121 = vector.broadcast %9 : f32 to vector<8x128xf32>
    %122 = arith.mulf %121, %113 : vector<8x128xf32>
    %123 = arith.addf %120, %122 : vector<8x128xf32>
    %cst_49 = arith.constant 5.000000e-01 : f32
    %124 = vector.broadcast %cst_49 : f32 to vector<8x128xf32>
    %125 = arith.mulf %124, %118 : vector<8x128xf32>
    %126 = math.tanh %125 : vector<8x128xf32>
    %cst_50 = arith.constant 5.000000e-01 : f32
    %127 = vector.broadcast %cst_50 : f32 to vector<8x128xf32>
    %128 = arith.mulf %127, %126 : vector<8x128xf32>
    %cst_51 = arith.constant 5.000000e-01 : f32
    %129 = vector.broadcast %cst_51 : f32 to vector<8x128xf32>
    %130 = arith.addf %128, %129 : vector<8x128xf32>
    %cst_52 = arith.constant 5.000000e-01 : f32
    %131 = vector.broadcast %cst_52 : f32 to vector<8x128xf32>
    %132 = arith.mulf %131, %123 : vector<8x128xf32>
    %133 = math.tanh %132 : vector<8x128xf32>
    %cst_53 = arith.constant 5.000000e-01 : f32
    %134 = vector.broadcast %cst_53 : f32 to vector<8x128xf32>
    %135 = arith.mulf %134, %133 : vector<8x128xf32>
    %cst_54 = arith.constant 5.000000e-01 : f32
    %136 = vector.broadcast %cst_54 : f32 to vector<8x128xf32>
    %137 = arith.addf %135, %136 : vector<8x128xf32>
    %c2_55 = arith.constant 2 : index
    %c0_56 = arith.constant 0 : index
    %c0_57 = arith.constant 0 : index
    %138 = vector.load %arg7[%c2_55, %c0_56, %c0_57] : memref<6x8x128xf32, #tpu.memory_space<vmem>>, vector<1x8x128xf32>
    %139 = vector.shape_cast %138 : vector<1x8x128xf32> to vector<8x128xf32>
    %140 = vector.broadcast %11 : f32 to vector<8x128xf32>
    %141 = arith.mulf %140, %113 : vector<8x128xf32>
    %142 = vector.broadcast %19 : f32 to vector<8x128xf32>
    %143 = arith.addf %141, %142 : vector<8x128xf32>
    %144 = arith.mulf %130, %143 : vector<8x128xf32>
    %145 = arith.addf %139, %144 : vector<8x128xf32>
    %146 = math.tanh %145 : vector<8x128xf32>
    %147 = arith.subf %113, %146 : vector<8x128xf32>
    %148 = arith.mulf %137, %147 : vector<8x128xf32>
    %149 = arith.addf %146, %148 : vector<8x128xf32>
    %c3_58 = arith.constant 3 : index
    %c0_59 = arith.constant 0 : index
    %c0_60 = arith.constant 0 : index
    %150 = vector.load %arg5[%c3_58, %c0_59, %c0_60] : memref<6x8x128xf32, #tpu.memory_space<vmem>>, vector<1x8x128xf32>
    %151 = vector.shape_cast %150 : vector<1x8x128xf32> to vector<8x128xf32>
    %152 = vector.broadcast %7 : f32 to vector<8x128xf32>
    %153 = arith.mulf %152, %149 : vector<8x128xf32>
    %154 = arith.addf %151, %153 : vector<8x128xf32>
    %c3_61 = arith.constant 3 : index
    %c0_62 = arith.constant 0 : index
    %c0_63 = arith.constant 0 : index
    %155 = vector.load %arg6[%c3_61, %c0_62, %c0_63] : memref<6x8x128xf32, #tpu.memory_space<vmem>>, vector<1x8x128xf32>
    %156 = vector.shape_cast %155 : vector<1x8x128xf32> to vector<8x128xf32>
    %157 = vector.broadcast %9 : f32 to vector<8x128xf32>
    %158 = arith.mulf %157, %149 : vector<8x128xf32>
    %159 = arith.addf %156, %158 : vector<8x128xf32>
    %cst_64 = arith.constant 5.000000e-01 : f32
    %160 = vector.broadcast %cst_64 : f32 to vector<8x128xf32>
    %161 = arith.mulf %160, %154 : vector<8x128xf32>
    %162 = math.tanh %161 : vector<8x128xf32>
    %cst_65 = arith.constant 5.000000e-01 : f32
    %163 = vector.broadcast %cst_65 : f32 to vector<8x128xf32>
    %164 = arith.mulf %163, %162 : vector<8x128xf32>
    %cst_66 = arith.constant 5.000000e-01 : f32
    %165 = vector.broadcast %cst_66 : f32 to vector<8x128xf32>
    %166 = arith.addf %164, %165 : vector<8x128xf32>
    %cst_67 = arith.constant 5.000000e-01 : f32
    %167 = vector.broadcast %cst_67 : f32 to vector<8x128xf32>
    %168 = arith.mulf %167, %159 : vector<8x128xf32>
    %169 = math.tanh %168 : vector<8x128xf32>
    %cst_68 = arith.constant 5.000000e-01 : f32
    %170 = vector.broadcast %cst_68 : f32 to vector<8x128xf32>
    %171 = arith.mulf %170, %169 : vector<8x128xf32>
    %cst_69 = arith.constant 5.000000e-01 : f32
    %172 = vector.broadcast %cst_69 : f32 to vector<8x128xf32>
    %173 = arith.addf %171, %172 : vector<8x128xf32>
    %c3_70 = arith.constant 3 : index
    %c0_71 = arith.constant 0 : index
    %c0_72 = arith.constant 0 : index
    %174 = vector.load %arg7[%c3_70, %c0_71, %c0_72] : memref<6x8x128xf32, #tpu.memory_space<vmem>>, vector<1x8x128xf32>
    %175 = vector.shape_cast %174 : vector<1x8x128xf32> to vector<8x128xf32>
    %176 = vector.broadcast %11 : f32 to vector<8x128xf32>
    %177 = arith.mulf %176, %149 : vector<8x128xf32>
    %178 = vector.broadcast %19 : f32 to vector<8x128xf32>
    %179 = arith.addf %177, %178 : vector<8x128xf32>
    %180 = arith.mulf %166, %179 : vector<8x128xf32>
    %181 = arith.addf %175, %180 : vector<8x128xf32>
    %182 = math.tanh %181 : vector<8x128xf32>
    %183 = arith.subf %149, %182 : vector<8x128xf32>
    %184 = arith.mulf %173, %183 : vector<8x128xf32>
    %185 = arith.addf %182, %184 : vector<8x128xf32>
    %c4_73 = arith.constant 4 : index
    %c0_74 = arith.constant 0 : index
    %c0_75 = arith.constant 0 : index
    %186 = vector.load %arg5[%c4_73, %c0_74, %c0_75] : memref<6x8x128xf32, #tpu.memory_space<vmem>>, vector<1x8x128xf32>
    %187 = vector.shape_cast %186 : vector<1x8x128xf32> to vector<8x128xf32>
    %188 = vector.broadcast %7 : f32 to vector<8x128xf32>
    %189 = arith.mulf %188, %185 : vector<8x128xf32>
    %190 = arith.addf %187, %189 : vector<8x128xf32>
    %c4_76 = arith.constant 4 : index
    %c0_77 = arith.constant 0 : index
    %c0_78 = arith.constant 0 : index
    %191 = vector.load %arg6[%c4_76, %c0_77, %c0_78] : memref<6x8x128xf32, #tpu.memory_space<vmem>>, vector<1x8x128xf32>
    %192 = vector.shape_cast %191 : vector<1x8x128xf32> to vector<8x128xf32>
    %193 = vector.broadcast %9 : f32 to vector<8x128xf32>
    %194 = arith.mulf %193, %185 : vector<8x128xf32>
    %195 = arith.addf %192, %194 : vector<8x128xf32>
    %cst_79 = arith.constant 5.000000e-01 : f32
    %196 = vector.broadcast %cst_79 : f32 to vector<8x128xf32>
    %197 = arith.mulf %196, %190 : vector<8x128xf32>
    %198 = math.tanh %197 : vector<8x128xf32>
    %cst_80 = arith.constant 5.000000e-01 : f32
    %199 = vector.broadcast %cst_80 : f32 to vector<8x128xf32>
    %200 = arith.mulf %199, %198 : vector<8x128xf32>
    %cst_81 = arith.constant 5.000000e-01 : f32
    %201 = vector.broadcast %cst_81 : f32 to vector<8x128xf32>
    %202 = arith.addf %200, %201 : vector<8x128xf32>
    %cst_82 = arith.constant 5.000000e-01 : f32
    %203 = vector.broadcast %cst_82 : f32 to vector<8x128xf32>
    %204 = arith.mulf %203, %195 : vector<8x128xf32>
    %205 = math.tanh %204 : vector<8x128xf32>
    %cst_83 = arith.constant 5.000000e-01 : f32
    %206 = vector.broadcast %cst_83 : f32 to vector<8x128xf32>
    %207 = arith.mulf %206, %205 : vector<8x128xf32>
    %cst_84 = arith.constant 5.000000e-01 : f32
    %208 = vector.broadcast %cst_84 : f32 to vector<8x128xf32>
    %209 = arith.addf %207, %208 : vector<8x128xf32>
    %c4_85 = arith.constant 4 : index
    %c0_86 = arith.constant 0 : index
    %c0_87 = arith.constant 0 : index
    %210 = vector.load %arg7[%c4_85, %c0_86, %c0_87] : memref<6x8x128xf32, #tpu.memory_space<vmem>>, vector<1x8x128xf32>
    %211 = vector.shape_cast %210 : vector<1x8x128xf32> to vector<8x128xf32>
    %212 = vector.broadcast %11 : f32 to vector<8x128xf32>
    %213 = arith.mulf %212, %185 : vector<8x128xf32>
    %214 = vector.broadcast %19 : f32 to vector<8x128xf32>
    %215 = arith.addf %213, %214 : vector<8x128xf32>
    %216 = arith.mulf %202, %215 : vector<8x128xf32>
    %217 = arith.addf %211, %216 : vector<8x128xf32>
    %218 = math.tanh %217 : vector<8x128xf32>
    %219 = arith.subf %185, %218 : vector<8x128xf32>
    %220 = arith.mulf %209, %219 : vector<8x128xf32>
    %221 = arith.addf %218, %220 : vector<8x128xf32>
    %c5_88 = arith.constant 5 : index
    %c0_89 = arith.constant 0 : index
    %c0_90 = arith.constant 0 : index
    %222 = vector.load %arg5[%c5_88, %c0_89, %c0_90] : memref<6x8x128xf32, #tpu.memory_space<vmem>>, vector<1x8x128xf32>
    %223 = vector.shape_cast %222 : vector<1x8x128xf32> to vector<8x128xf32>
    %224 = vector.broadcast %7 : f32 to vector<8x128xf32>
    %225 = arith.mulf %224, %221 : vector<8x128xf32>
    %226 = arith.addf %223, %225 : vector<8x128xf32>
    %c5_91 = arith.constant 5 : index
    %c0_92 = arith.constant 0 : index
    %c0_93 = arith.constant 0 : index
    %227 = vector.load %arg6[%c5_91, %c0_92, %c0_93] : memref<6x8x128xf32, #tpu.memory_space<vmem>>, vector<1x8x128xf32>
    %228 = vector.shape_cast %227 : vector<1x8x128xf32> to vector<8x128xf32>
    %229 = vector.broadcast %9 : f32 to vector<8x128xf32>
    %230 = arith.mulf %229, %221 : vector<8x128xf32>
    %231 = arith.addf %228, %230 : vector<8x128xf32>
    %cst_94 = arith.constant 5.000000e-01 : f32
    %232 = vector.broadcast %cst_94 : f32 to vector<8x128xf32>
    %233 = arith.mulf %232, %226 : vector<8x128xf32>
    %234 = math.tanh %233 : vector<8x128xf32>
    %cst_95 = arith.constant 5.000000e-01 : f32
    %235 = vector.broadcast %cst_95 : f32 to vector<8x128xf32>
    %236 = arith.mulf %235, %234 : vector<8x128xf32>
    %cst_96 = arith.constant 5.000000e-01 : f32
    %237 = vector.broadcast %cst_96 : f32 to vector<8x128xf32>
    %238 = arith.addf %236, %237 : vector<8x128xf32>
    %cst_97 = arith.constant 5.000000e-01 : f32
    %239 = vector.broadcast %cst_97 : f32 to vector<8x128xf32>
    %240 = arith.mulf %239, %231 : vector<8x128xf32>
    %241 = math.tanh %240 : vector<8x128xf32>
    %cst_98 = arith.constant 5.000000e-01 : f32
    %242 = vector.broadcast %cst_98 : f32 to vector<8x128xf32>
    %243 = arith.mulf %242, %241 : vector<8x128xf32>
    %cst_99 = arith.constant 5.000000e-01 : f32
    %244 = vector.broadcast %cst_99 : f32 to vector<8x128xf32>
    %245 = arith.addf %243, %244 : vector<8x128xf32>
    %c5_100 = arith.constant 5 : index
    %c0_101 = arith.constant 0 : index
    %c0_102 = arith.constant 0 : index
    %246 = vector.load %arg7[%c5_100, %c0_101, %c0_102] : memref<6x8x128xf32, #tpu.memory_space<vmem>>, vector<1x8x128xf32>
    %247 = vector.shape_cast %246 : vector<1x8x128xf32> to vector<8x128xf32>
    %248 = vector.broadcast %11 : f32 to vector<8x128xf32>
    %249 = arith.mulf %248, %221 : vector<8x128xf32>
    %250 = vector.broadcast %19 : f32 to vector<8x128xf32>
    %251 = arith.addf %249, %250 : vector<8x128xf32>
    %252 = arith.mulf %238, %251 : vector<8x128xf32>
    %253 = arith.addf %247, %252 : vector<8x128xf32>
    %254 = math.tanh %253 : vector<8x128xf32>
    %255 = arith.subf %221, %254 : vector<8x128xf32>
    %256 = arith.mulf %245, %255 : vector<8x128xf32>
    %257 = arith.addf %254, %256 : vector<8x128xf32>
    %258 = vector.broadcast %21 : f32 to vector<8x128xf32>
    %259 = arith.mulf %258, %257 : vector<8x128xf32>
    %260 = vector.broadcast %23 : f32 to vector<8x128xf32>
    %261 = arith.addf %259, %260 : vector<8x128xf32>
    %c0_103 = arith.constant 0 : index
    %c0_104 = arith.constant 0 : index
    %c0_105 = arith.constant 0 : index
    %262 = vector.load %arg4[%c0_103, %c0_104, %c0_105] : memref<1x8x128xf32, #tpu.memory_space<vmem>>, vector<1x8x128xf32>
    %263 = vector.shape_cast %262 : vector<1x8x128xf32> to vector<8x128xf32>
    %264 = vector.shape_cast %261 : vector<8x128xf32> to vector<1x8x128xf32>
    tpu.vector_store %arg4[%c0_103, %c0_104, %c0_105], %264 {strides = array<i32>} : memref<1x8x128xf32, #tpu.memory_space<vmem>>, vector<1x8x128xf32>,
    return
  }
  func.func @transform_0(%arg0: i32, %arg1: i32) -> (i32, i32) {
    %c0_i32 = arith.constant 0 : i32
    %c0_i32_0 = arith.constant 0 : i32
    %c0_i32_1 = arith.constant 0 : i32
    return %c0_i32, %c0_i32_0 : i32, i32
  }
  func.func @transform_1(%arg0: i32, %arg1: i32) -> (i32, i32, i32, i32) {
    %c0_i32 = arith.constant 0 : i32
    %c0_i32_0 = arith.constant 0 : i32
    %c0_i32_1 = arith.constant 0 : i32
    return %arg0, %c0_i32, %c0_i32_0, %arg1 : i32, i32, i32, i32
  }
  func.func @transform_2(%arg0: i32, %arg1: i32) -> (i32, i32, i32) {
    %c0_i32 = arith.constant 0 : i32
    %c0_i32_0 = arith.constant 0 : i32
    return %arg0, %c0_i32, %arg1 : i32, i32, i32
  }
}

</mosaic_0001>

<llo_original>
// kernel: grunet_forward_clients_time_major.1
$region0: #{grunet_forward_clients_time_major.1}
  #allocation0 [shape = 'u32[]', space=smem, size = 0x4, offset = 0x4, fixed_abs, tag = 'smem constant byte address 0x4 - core index']
  #allocation1 [shape = 'u32[144,128]{1,0:T(1,128)}', space=vmem, size = 0x12000, scoped, tag = 'internal scratch']
  #allocation2 [shape = 'f32[6,8,128]{2,1,0:T(8,128)}', space=vmem, size = 0x6000, scoped, tag = 'scratch operand']
  #allocation3 [shape = 'f32[6,8,128]{2,1,0:T(8,128)}', space=vmem, size = 0x6000, scoped, tag = 'scratch operand']
  #allocation4 [shape = 'f32[6,8,128]{2,1,0:T(8,128)}', space=vmem, size = 0x6000, scoped, tag = 'scratch operand']
  %s0 = inlined_call_operand.vmem [shape: f32[3,16], index: 0, kind: input, shape index: {}]
  %s1 = inlined_call_operand.vmem [shape: f32[3,6,8,128], index: 1, kind: input, shape index: {}]
  %s2 = inlined_call_operand.vmem [shape: f32[3,8,128], index: 2, kind: output, shape index: {}]
  %s3 = sld [smem:[#allocation0]]
  $region45: #{grunet_forward_clients_time_major.1} parent=0
    _
  %s5 = ssub.s32 1, %s3
  %s6 = scalar_select 0, %s5, %s3
  $region1: #{grunet_forward_clients_time_major.1} parent=0
    #allocation5 [shape = 'u8[2048]{0}', space=smem, size = 0x800, scoped, tag = 'input window, operand 0, single buffered']
    #allocation6 [shape = 's32[2]{0}', space=sflag, size = 0x8, scoped, tag = 'scoped memory for grunet_forward_clients_time_major.1']
    %7 = vsyncpa [#allocation6], 0
    loop: start=0, step=1, limit=5
    $region2: #{grunet_forward_clients_time_major.1} parent=1 // loop_pre_header
      _
    $region3: #{grunet_forward_clients_time_major.1} parent=1 // loop_header
      %s9 = sphi 0, %s13
      %p10 = scmp.ge.s32.totalorder %s9, 5
      %s16 = sphi 0, %s28
      %s17 = sphi 0, %s24
      %s18 = sphi 0, %s16
      %s19 = sphi 0, %s17
      %s20 = sphi 0, %s18
      %s21 = sphi 0, %s19
      %s29 = sphi 0, %s29
      %s31 = sphi 0, %s29
      %s32 = sphi 0, %s31
      %s46 = sphi 0, %s32
      %s54 = sphi 0, %s56
      %s57 = sphi 0, %s54
      %s58 = sphi 0, %s57
      %s74 = sphi 0, %s58
      %s82 = sphi 0, %s84
      %s85 = sphi 0, %s82
      %s86 = sphi 0, %s85
      %s102 = sphi 0, %s86
    $region4: #{grunet_forward_clients_time_major.1} parent=1 // loop_header_branch
      %12 = sbr.rel (%p10) target = $region8
    $region5: #{grunet_forward_clients_time_major.1} parent=1 // loop_body
      %s14 = ssub.s32 %s9, 1
      %s15 = ssub.s32 %s9, 2
      %s22 = sadd.s32 1, %s17
      %p23 = scmp.ge.s32.totalorder %s22, 1
      %s24 = scalar_select %p23, 0, %s22
      %s25 = sadd.s32 1, %s16
      %s26 = scalar_select %p23, %s25, %s16
      %p27 = scmp.ge.s32.totalorder %s26, 3
      %s28 = scalar_select %p27, 0, %s26
      %s30 = sadd.s32 %s29, 1
      %p33 = scmp.eq.s32.totalorder %s9, 2
      %p34 = scmp.ne.s32.totalorder %s29, %s31
      %p35 = scmp.eq.s32.totalorder %s9, 0
      %p36 = por %p34, %p35
      %p37 = scmp.ne.s32.totalorder %s29, %s31
      %p38 = scmp.eq.s32.totalorder %s14, 2
      %p39 = por %p37, %p38
      %p40 = scmp.ne.s32.totalorder %s31, %s32
      %p41 = scmp.eq.s32.totalorder %s14, 0
      %p42 = por %p40, %p41
      %p43 = scmp.ne.s32.totalorder %s31, %s32
      %p44 = scmp.eq.s32.totalorder %s15, 2
      %p45 = por %p43, %p44
      %p47 = scmp.ne.s32.totalorder %s32, %s46
      %p48 = scmp.eq.s32.totalorder %s15, 0
      %p49 = por %p47, %p48
      %s50 = ssub.s32 %s16, %s28
      %s51 = ssub.s32 %s17, %s24
      %s52 = sor.u32 %s50, %s51
      %p53 = scmp.eq.s32.totalorder %s52, 0
      %s55 = sadd.s32 %s54, 1
      %s56 = scalar_select %p53, %s54, %s55
      %p59 = pneg %p53
      %p60 = scmp.eq.s32.totalorder %s9, 2
      %p61 = por %p59, %p60
      %p62 = scmp.ne.s32.totalorder %s54, %s57
      %p63 = scmp.eq.s32.totalorder %s9, 0
      %p64 = por %p62, %p63
      %p65 = scmp.ne.s32.totalorder %s54, %s57
      %p66 = scmp.eq.s32.totalorder %s14, 2
      %p67 = por %p65, %p66
      %p68 = scmp.ne.s32.totalorder %s57, %s58
      %p69 = scmp.eq.s32.totalorder %s14, 0
      %p70 = por %p68, %p69
      %p71 = scmp.ne.s32.totalorder %s57, %s58
      %p72 = scmp.eq.s32.totalorder %s15, 2
      %p73 = por %p71, %p72
      %p75 = scmp.ne.s32.totalorder %s58, %s74
      %p76 = scmp.eq.s32.totalorder %s15, 0
      %p77 = por %p75, %p76
      %s78 = ssub.s32 %s16, %s28
      %s79 = ssub.s32 %s17, %s24
      %s80 = sor.u32 %s78, %s79
      %p81 = scmp.eq.s32.totalorder %s80, 0
      %s83 = sadd.s32 %s82, 1
      %s84 = scalar_select %p81, %s82, %s83
      %p87 = pneg %p81
      %p88 = scmp.eq.s32.totalorder %s9, 2
      %p89 = por %p87, %p88
      %p90 = scmp.ne.s32.totalorder %s82, %s85
      %p91 = scmp.eq.s32.totalorder %s9, 0
      %p92 = por %p90, %p91
      %p93 = scmp.ne.s32.totalorder %s82, %s85
      %p94 = scmp.eq.s32.totalorder %s14, 2
      %p95 = por %p93, %p94
      %p96 = scmp.ne.s32.totalorder %s85, %s86
      %p97 = scmp.eq.s32.totalorder %s14, 0
      %p98 = por %p96, %p97
      %p99 = scmp.ne.s32.totalorder %s85, %s86
      %p100 = scmp.eq.s32.totalorder %s15, 2
      %p101 = por %p99, %p100
      %p103 = scmp.ne.s32.totalorder %s86, %s102
      %p104 = scmp.eq.s32.totalorder %s15, 0
      %p105 = por %p103, %p104
      %p106 = scmp.le.s32.totalorder 1, %s9
      %p107 = scmp.lt.s32.totalorder %s9, 4
      %p108 = pnand %p106, %p107
      %p109 = pneg %p108
      // Predicated region
      $region9: #{grunet_forward_clients_time_major.1} parent=5 // pred_check
        _
      $region10: #{grunet_forward_clients_time_major.1} parent=5 // pred_check_branch
        %111 = sbr.rel (%p108) target = $region12
      $region11: #{grunet_forward_clients_time_major.1} parent=5 // pred_region
        %s112 = ssub.s32 %s9, 1
        // Predicated region
        $region13: #{grunet_forward_clients_time_major.1} parent=11 // pred_check
          %p113 = pneg %p42
        $region14: #{grunet_forward_clients_time_major.1} parent=11 // pred_check_branch
          %115 = sbr.rel (%p113) target = $region16
        $region15: #{grunet_forward_clients_time_major.1} parent=11 // pred_region
          %s117 = ssub.s32 64, 64
          %118 = vsyncadd [#allocation6], %s117
          %s120 = sshll.u32 %s0, 4
          %s121 = int_to_ptr.vmem [resolvable:$true] %s120
          %123 = dma.vmem_to_smem %s121, 64, [#allocation5], [#allocation6]
        $region16: #{grunet_forward_clients_time_major.1} parent=11 // pred_fallthru
          _
      $region12: #{grunet_forward_clients_time_major.1} parent=5 // pred_fallthru
        _
      %p124 = scmp.lt.s32.totalorder %s9, 3
      // Predicated region
      $region17: #{grunet_forward_clients_time_major.1} parent=5 // pred_check
        %p125 = pneg %p124
      $region18: #{grunet_forward_clients_time_major.1} parent=5 // pred_check_branch
        %127 = sbr.rel (%p125) target = $region20
      $region19: #{grunet_forward_clients_time_major.1} parent=5 // pred_region
        // Predicated region
        $region21: #{grunet_forward_clients_time_major.1} parent=19 // pred_check
          %p128 = pneg %p64
        $region22: #{grunet_forward_clients_time_major.1} parent=19 // pred_check_branch
          %130 = sbr.rel (%p128) target = $region24
        $region23: #{grunet_forward_clients_time_major.1} parent=19 // pred_region
          %p131 = scmp.lt.s32.totalorder %s16, 2
          %s132 = scalar_select %p131, %s16, 2
          %p133 = scmp.lt.s32.totalorder %s17, 0
          %s134 = scalar_select %p133, %s17, 0
          %s135 = smul.addr %s132, 6
          %s136 = sadd.s32 %s134, %s135
          %s137 = smul.addr %s136, 8
          %s138 = scalar_lea.vmem %s1, %s137
        $region24: #{grunet_forward_clients_time_major.1} parent=19 // pred_fallthru
          _
      $region20: #{grunet_forward_clients_time_major.1} parent=5 // pred_fallthru
        _
      %p139 = scmp.le.s32.totalorder 1, %s9
      %p140 = scmp.lt.s32.totalorder %s9, 4
      %p141 = pnand %p139, %p140
      %p142 = pneg %p141
      // Predicated region
      $region25: #{grunet_forward_clients_time_major.1} parent=5 // pred_check
        _
      $region26: #{grunet_forward_clients_time_major.1} parent=5 // pred_check_branch
        %144 = sbr.rel (%p141) target = $region28
      $region27: #{grunet_forward_clients_time_major.1} parent=5 // pred_region
        %s145 = ssub.s32 %s9, 1
        // Predicated region
        $region29: #{grunet_forward_clients_time_major.1} parent=27 // pred_check
          %p146 = pneg %p42
        $region30: #{grunet_forward_clients_time_major.1} parent=27 // pred_check_branch
          %148 = sbr.rel (%p146) target = $region32
        $region31: #{grunet_forward_clients_time_major.1} parent=27 // pred_region
          %149 = dma.done [#allocation6], 64
        $region32: #{grunet_forward_clients_time_major.1} parent=27 // pred_fallthru
          _
        %150 = sfence
        %p151 = pneg %p42
        %p152 = pneg %p39
        %p153 = scmp.lt.s32.totalorder %s18, 2
        %s154 = scalar_select %p153, %s18, 2
        %p155 = scmp.lt.s32.totalorder %s19, 0
        %s156 = scalar_select %p155, %s19, 0
        %s157 = smul.addr %s154, 6
        %s158 = sadd.s32 %s156, %s157
        %s159 = smul.addr %s158, 8
        %s160 = scalar_lea.vmem %s1, %s159
        %p161 = pneg %p70
        %p162 = pneg %p67
        %p163 = pneg %p98
        %p164 = pneg %p95
        %p165 = scmp.lt.s32.totalorder %s18, 2
        %s166 = scalar_select %p165, %s18, 2
        %p167 = scmp.lt.s32.totalorder %s19, 0
        %s168 = scalar_select %p167, %s19, 0
        %s169 = sadd.s32 %s168, %s166
        %s170 = smul.addr %s169, 8
        %s171 = scalar_lea.vmem %s2, %s170
        %p172 = scmp.lt.s32.totalorder %s18, 2
        %s173 = scalar_select %p172, %s18, 2
        %p174 = scmp.lt.s32.totalorder %s19, 0
        %s175 = scalar_select %p174, %s19, 0
        %s176 = smul.addr %s173, 6
        %s177 = sadd.s32 %s175, %s176
        %s178 = smul.addr %s177, 8
        %s179 = scalar_lea.vmem %s1, %s178
        %p180 = scmp.lt.s32.totalorder %s18, 2
        %s181 = scalar_select %p180, %s18, 2
        %p182 = scmp.lt.s32.totalorder %s19, 0
        %s183 = scalar_select %p182, %s19, 0
        %s184 = sadd.s32 %s183, %s181
        %s185 = smul.addr %s184, 8
        %s186 = scalar_lea.vmem %s2, %s185
        %s187 = smul.u32 %s18, 128
        %s188 = sld [smem:[#allocation5 + %s187]]
        %s189 = sadd.s32 %s187, 1
        %s190 = sld [smem:[#allocation5 + %s189]]
        %s191 = sadd.s32 %s187, 2
        %s192 = sld [smem:[#allocation5 + %s191]]
        %s193 = sadd.s32 %s187, 3
        %s194 = sld [smem:[#allocation5 + %s193]]
        %s195 = sadd.s32 %s187, 4
        %s196 = sld [smem:[#allocation5 + %s195]]
        %s197 = sadd.s32 %s187, 5
        %s198 = sld [smem:[#allocation5 + %s197]]
        %s199 = sadd.s32 %s187, 6
        %s200 = sld [smem:[#allocation5 + %s199]]
        %s201 = sadd.s32 %s187, 7
        %s202 = sld [smem:[#allocation5 + %s201]]
        %s203 = sadd.s32 %s187, 8
        %s204 = sld [smem:[#allocation5 + %s203]]
        %s205 = sadd.s32 %s187, 9
        %s206 = sld [smem:[#allocation5 + %s205]]
        %s207 = sadd.s32 %s187, 10
        %s208 = sld [smem:[#allocation5 + %s207]]
        %s209 = sadd.s32 %s187, 11
        %s210 = sld [smem:[#allocation5 + %s209]]
        %v211 = vld [vmem:[%s179] sm:$0xff]
        %v212 = vld [vmem:[%s179 + $0x8] sm:$0xff]
        %v213 = vld [vmem:[%s179 + $0x10] sm:$0xff]
        %v214 = vld [vmem:[%s179 + $0x18] sm:$0xff]
        %v215 = vld [vmem:[%s179 + $0x20] sm:$0xff]
        %v216 = vld [vmem:[%s179 + $0x28] sm:$0xff]
        %v217 = vstv %s188
        %v218 = vmul.f32 %v217, %v211
        %v219 = vmul.f32 %v217, %v212
        %v220 = vmul.f32 %v217, %v213
        %v221 = vmul.f32 %v217, %v214
        %v222 = vmul.f32 %v217, %v215
        %v223 = vmul.f32 %v217, %v216
        %v224 = vstv %s200
        %v225 = vadd.f32 %v218, %v224
        %v226 = vadd.f32 %v219, %v224
        %v227 = vadd.f32 %v220, %v224
        %v228 = vadd.f32 %v221, %v224
        %v229 = vadd.f32 %v222, %v224
        %v230 = vadd.f32 %v223, %v224
        %231 = vst [vmem:[#allocation2] sm:$0xff] %v225
        %232 = vst [vmem:[#allocation2 + $0x8] sm:$0xff] %v226
        %233 = vst [vmem:[#allocation2 + $0x10] sm:$0xff] %v227
        %234 = vst [vmem:[#allocation2 + $0x18] sm:$0xff] %v228
        %235 = vst [vmem:[#allocation2 + $0x20] sm:$0xff] %v229
        %236 = vst [vmem:[#allocation2 + $0x28] sm:$0xff] %v230
        %v237 = vstv %s190
        %v238 = vmul.f32 %v237, %v211
        %v239 = vmul.f32 %v237, %v212
        %v240 = vmul.f32 %v237, %v213
        %v241 = vmul.f32 %v237, %v214
        %v242 = vmul.f32 %v237, %v215
        %v243 = vmul.f32 %v237, %v216
        %v244 = vstv %s202
        %v245 = vadd.f32 %v238, %v244
        %v246 = vadd.f32 %v239, %v244
        %v247 = vadd.f32 %v240, %v244
        %v248 = vadd.f32 %v241, %v244
        %v249 = vadd.f32 %v242, %v244
        %v250 = vadd.f32 %v243, %v244
        %251 = vst [vmem:[#allocation3] sm:$0xff] %v245
        %252 = vst [vmem:[#allocation3 + $0x8] sm:$0xff] %v246
        %253 = vst [vmem:[#allocation3 + $0x10] sm:$0xff] %v247
        %254 = vst [vmem:[#allocation3 + $0x18] sm:$0xff] %v248
        %255 = vst [vmem:[#allocation3 + $0x20] sm:$0xff] %v249
        %256 = vst [vmem:[#allocation3 + $0x28] sm:$0xff] %v250
        %v257 = vstv %s192
        %v258 = vmul.f32 %v257, %v211
        %v259 = vmul.f32 %v257, %v212
        %v260 = vmul.f32 %v257, %v213
        %v261 = vmul.f32 %v257, %v214
        %v262 = vmul.f32 %v257, %v215
        %v263 = vmul.f32 %v257, %v216
        %v264 = vstv %s204
        %v265 = vadd.f32 %v258, %v264
        %v266 = vadd.f32 %v259, %v264
        %v267 = vadd.f32 %v260, %v264
        %v268 = vadd.f32 %v261, %v264
        %v269 = vadd.f32 %v262, %v264
        %v270 = vadd.f32 %v263, %v264
        %271 = vst [vmem:[#allocation4] sm:$0xff] %v265
        %272 = vst [vmem:[#allocation4 + $0x8] sm:$0xff] %v266
        %273 = vst [vmem:[#allocation4 + $0x10] sm:$0xff] %v267
        %274 = vst [vmem:[#allocation4 + $0x18] sm:$0xff] %v268
        %275 = vst [vmem:[#allocation4 + $0x20] sm:$0xff] %v269
        %276 = vst [vmem:[#allocation4 + $0x28] sm:$0xff] %v270
        %v277 = vld [vmem:[#allocation2] sm:$0xff]
        %v278 = vstv %s194
        %v279 = vmul.f32 %v278, 0.0
        %v280 = vadd.f32 %v277, %v279
        %v281 = vld [vmem:[#allocation3] sm:$0xff]
        %v282 = vstv %s196
        %v283 = vmul.f32 %v282, 0.0
        %v284 = vadd.f32 %v281, %v283
        %v285 = vmul.f32 %v280, 0.5
        %v286 = vtanh.pop %v285
        %v287 = vmul.f32 %v286, 0.5
        %v288 = vadd.f32 %v287, 0.5
        %v289 = vmul.f32 %v284, 0.5
        %v290 = vtanh.pop %v289
        %v291 = vmul.f32 %v290, 0.5
        %v292 = vadd.f32 %v291, 0.5
        %v293 = vld [vmem:[#allocation4] sm:$0xff]
        %v294 = vstv %s198
        %v295 = vmul.f32 %v294, 0.0
        %v296 = vstv %s206
        %v297 = vadd.f32 %v295, %v296
        %v298 = vmul.f32 %v288, %v297
        %v299 = vadd.f32 %v293, %v298
        %v300 = vtanh.pop %v299
        %v301 = vsub.f32 0.0, %v300
        %v302 = vmul.f32 %v292, %v301
        %v303 = vadd.f32 %v300, %v302
        %s304 = scalar_lea.vmem [#allocation2], 8
        %v305 = vld [vmem:[%s304] sm:$0xff]
        %v306 = vmul.f32 %v278, %v303
        %v307 = vadd.f32 %v305, %v306
        %s308 = scalar_lea.vmem [#allocation3], 8
        %v309 = vld [vmem:[%s308] sm:$0xff]
        %v310 = vmul.f32 %v282, %v303
        %v311 = vadd.f32 %v309, %v310
        %v312 = vmul.f32 %v307, 0.5
        %v313 = vtanh.pop %v312
        %v314 = vmul.f32 %v313, 0.5
        %v315 = vadd.f32 %v314, 0.5
        %v316 = vmul.f32 %v311, 0.5
        %v317 = vtanh.pop %v316
        %v318 = vmul.f32 %v317, 0.5
        %v319 = vadd.f32 %v318, 0.5
        %s320 = scalar_lea.vmem [#allocation4], 8
        %v321 = vld [vmem:[%s320] sm:$0xff]
        %v322 = vmul.f32 %v294, %v303
        %v323 = vadd.f32 %v322, %v296
        %v324 = vmul.f32 %v315, %v323
        %v325 = vadd.f32 %v321, %v324
        %v326 = vtanh.pop %v325
        %v327 = vsub.f32 %v303, %v326
        %v328 = vmul.f32 %v319, %v327
        %v329 = vadd.f32 %v326, %v328
        %s330 = scalar_lea.vmem [#allocation2], 16
        %v331 = vld [vmem:[%s330] sm:$0xff]
        %v332 = vmul.f32 %v278, %v329
        %v333 = vadd.f32 %v331, %v332
        %s334 = scalar_lea.vmem [#allocation3], 16
        %v335 = vld [vmem:[%s334] sm:$0xff]
        %v336 = vmul.f32 %v282, %v329
        %v337 = vadd.f32 %v335, %v336
        %v338 = vmul.f32 %v333, 0.5
        %v339 = vtanh.pop %v338
        %v340 = vmul.f32 %v339, 0.5
        %v341 = vadd.f32 %v340, 0.5
        %v342 = vmul.f32 %v337, 0.5
        %v343 = vtanh.pop %v342
        %v344 = vmul.f32 %v343, 0.5
        %v345 = vadd.f32 %v344, 0.5
        %s346 = scalar_lea.vmem [#allocation4], 16
        %v347 = vld [vmem:[%s346] sm:$0xff]
        %v348 = vmul.f32 %v294, %v329
        %v349 = vadd.f32 %v348, %v296
        %v350 = vmul.f32 %v341, %v349
        %v351 = vadd.f32 %v347, %v350
        %v352 = vtanh.pop %v351
        %v353 = vsub.f32 %v329, %v352
        %v354 = vmul.f32 %v345, %v353
        %v355 = vadd.f32 %v352, %v354
        %s356 = scalar_lea.vmem [#allocation2], 24
        %v357 = vld [vmem:[%s356] sm:$0xff]
        %v358 = vmul.f32 %v278, %v355
        %v359 = vadd.f32 %v357, %v358
        %s360 = scalar_lea.vmem [#allocation3], 24
        %v361 = vld [vmem:[%s360] sm:$0xff]
        %v362 = vmul.f32 %v282, %v355
        %v363 = vadd.f32 %v361, %v362
        %v364 = vmul.f32 %v359, 0.5
        %v365 = vtanh.pop %v364
        %v366 = vmul.f32 %v365, 0.5
        %v367 = vadd.f32 %v366, 0.5
        %v368 = vmul.f32 %v363, 0.5
        %v369 = vtanh.pop %v368
        %v370 = vmul.f32 %v369, 0.5
        %v371 = vadd.f32 %v370, 0.5
        %s372 = scalar_lea.vmem [#allocation4], 24
        %v373 = vld [vmem:[%s372] sm:$0xff]
        %v374 = vmul.f32 %v294, %v355
        %v375 = vadd.f32 %v374, %v296
        %v376 = vmul.f32 %v367, %v375
        %v377 = vadd.f32 %v373, %v376
        %v378 = vtanh.pop %v377
        %v379 = vsub.f32 %v355, %v378
        %v380 = vmul.f32 %v371, %v379
        %v381 = vadd.f32 %v378, %v380
        %s382 = scalar_lea.vmem [#allocation2], 32
        %v383 = vld [vmem:[%s382] sm:$0xff]
        %v384 = vmul.f32 %v278, %v381
        %v385 = vadd.f32 %v383, %v384
        %s386 = scalar_lea.vmem [#allocation3], 32
        %v387 = vld [vmem:[%s386] sm:$0xff]
        %v388 = vmul.f32 %v282, %v381
        %v389 = vadd.f32 %v387, %v388
        %v390 = vmul.f32 %v385, 0.5
        %v391 = vtanh.pop %v390
        %v392 = vmul.f32 %v391, 0.5
        %v393 = vadd.f32 %v392, 0.5
        %v394 = vmul.f32 %v389, 0.5
        %v395 = vtanh.pop %v394
        %v396 = vmul.f32 %v395, 0.5
        %v397 = vadd.f32 %v396, 0.5
        %s398 = scalar_lea.vmem [#allocation4], 32
        %v399 = vld [vmem:[%s398] sm:$0xff]
        %v400 = vmul.f32 %v294, %v381
        %v401 = vadd.f32 %v400, %v296
        %v402 = vmul.f32 %v393, %v401
        %v403 = vadd.f32 %v399, %v402
        %v404 = vtanh.pop %v403
        %v405 = vsub.f32 %v381, %v404
        %v406 = vmul.f32 %v397, %v405
        %v407 = vadd.f32 %v404, %v406
        %s408 = scalar_lea.vmem [#allocation2], 40
        %v409 = vld [vmem:[%s408] sm:$0xff]
        %v410 = vmul.f32 %v278, %v407
        %v411 = vadd.f32 %v409, %v410
        %s412 = scalar_lea.vmem [#allocation3], 40
        %v413 = vld [vmem:[%s412] sm:$0xff]
        %v414 = vmul.f32 %v282, %v407
        %v415 = vadd.f32 %v413, %v414
        %v416 = vmul.f32 %v411, 0.5
        %v417 = vtanh.pop %v416
        %v418 = vmul.f32 %v417, 0.5
        %v419 = vadd.f32 %v418, 0.5
        %v420 = vmul.f32 %v415, 0.5
        %v421 = vtanh.pop %v420
        %v422 = vmul.f32 %v421, 0.5
        %v423 = vadd.f32 %v422, 0.5
        %s424 = scalar_lea.vmem [#allocation4], 40
        %v425 = vld [vmem:[%s424] sm:$0xff]
        %v426 = vmul.f32 %v294, %v407
        %v427 = vadd.f32 %v426, %v296
        %v428 = vmul.f32 %v419, %v427
        %v429 = vadd.f32 %v425, %v428
        %v430 = vtanh.pop %v429
        %v431 = vsub.f32 %v407, %v430
        %v432 = vmul.f32 %v423, %v431
        %v433 = vadd.f32 %v430, %v432
        %v434 = vstv %s208
        %v435 = vmul.f32 %v434, %v433
        %v436 = vstv %s210
        %v437 = vadd.f32 %v435, %v436
        %438 = vst [vmem:[%s186] sm:$0xff] %v437
        %p439 = scmp.lt.s32.totalorder %s18, 2
        %s440 = scalar_select %p439, %s18, 2
        %p441 = scmp.lt.s32.totalorder %s19, 0
        %s442 = scalar_select %p441, %s19, 0
        %s443 = sadd.s32 %s442, %s440
        %s444 = smul.addr %s443, 8
        %s445 = scalar_lea.vmem %s2, %s444
        // Predicated region
        $region33: #{grunet_forward_clients_time_major.1} parent=27 // pred_check
          %p446 = pneg %p95
        $region34: #{grunet_forward_clients_time_major.1} parent=27 // pred_check_branch
          %448 = sbr.rel (%p446) target = $region36
        $region35: #{grunet_forward_clients_time_major.1} parent=27 // pred_region
          _
        $region36: #{grunet_forward_clients_time_major.1} parent=27 // pred_fallthru
          _
      $region28: #{grunet_forward_clients_time_major.1} parent=5 // pred_fallthru
        _
      %p449 = scmp.le.s32.totalorder 2, %s9
      // Predicated region
      $region37: #{grunet_forward_clients_time_major.1} parent=5 // pred_check
        %p450 = pneg %p449
      $region38: #{grunet_forward_clients_time_major.1} parent=5 // pred_check_branch
        %452 = sbr.rel (%p450) target = $region40
      $region39: #{grunet_forward_clients_time_major.1} parent=5 // pred_region
        %s453 = ssub.s32 %s9, 2
        // Predicated region
        $region41: #{grunet_forward_clients_time_major.1} parent=39 // pred_check
          %p454 = pneg %p101
        $region42: #{grunet_forward_clients_time_major.1} parent=39 // pred_check_branch
          %456 = sbr.rel (%p454) target = $region44
        $region43: #{grunet_forward_clients_time_major.1} parent=39 // pred_region
          %p457 = scmp.lt.s32.totalorder %s20, 2
          %s458 = scalar_select %p457, %s20, 2
          %p459 = scmp.lt.s32.totalorder %s21, 0
          %s460 = scalar_select %p459, %s21, 0
          %s461 = sadd.s32 %s460, %s458
          %s462 = smul.addr %s461, 8
          %s463 = scalar_lea.vmem %s2, %s462
        $region44: #{grunet_forward_clients_time_major.1} parent=39 // pred_fallthru
          _
      $region40: #{grunet_forward_clients_time_major.1} parent=5 // pred_fallthru
        _
    $region6: #{grunet_forward_clients_time_major.1} parent=1 // loop_footer
      %s13 = sadd.s32 1, %s9
    $region7: #{grunet_forward_clients_time_major.1} parent=1 // loop_footer_branch
      %8 = sbr.rel target = $region3
    $region8: #{grunet_forward_clients_time_major.1} parent=1 // loop_exit
      _
    %464 = vsyncpa [#allocation6], 1
    %s465 = scalar_lea.sflag [#allocation6], 1
    %466 = vsyncpa %s465, 1

</llo_original>
